<compile_context>
chip_gen: v7x
topology: tpu7x:2x2x1
jax: 0.10.0
libtpu: 0.0.40
codegen_flags: <defaults>
</compile_context>

<pallas_src>
import functools
import math

import jax
import jax.numpy as jnp
from jax import lax
from jax.experimental import pallas as pl
from jax.experimental.pallas import tpu as pltpu


_MASK = -1e30  # finite "minus infinity" for padded key columns (exp -> 0, no NaN)


def _qkv_proj_kernel(x_ref, w_ref, q_ref, k_ref, v_ref, *, dk_pad, scale):
    """Fused Q|K|V projection for one (batch, seq-tile): one wide MXU matmul."""
    x = x_ref[0]                                                       # (ts, d_model)
    qkv = jnp.dot(x, w_ref[...], preferred_element_type=jnp.float32)   # (ts, 3*dk_pad)
    # Static, 128-aligned lane slices -> no layout copies.
    q_ref[0] = (qkv[:, 0:dk_pad] * scale).astype(q_ref.dtype)          # scale q once
    k_ref[0] = qkv[:, dk_pad:2 * dk_pad].astype(k_ref.dtype)
    v_ref[0] = qkv[:, 2 * dk_pad:3 * dk_pad].astype(v_ref.dtype)


def _flash_attn_kernel(q_ref, k_ref, v_ref, o_ref, m_sc, l_sc, acc_sc,
                       *, s_len, tk, masked):
    """One (batch, q-tile, kv-tile) grid step of online-softmax attention."""
    ki = pl.program_id(2)

    @pl.when(ki == 0)
    def _init():
        m_sc[...] = jnp.full_like(m_sc, -jnp.inf)
        l_sc[...] = jnp.zeros_like(l_sc)
        acc_sc[...] = jnp.zeros_like(acc_sc)

    # Scores: contract d_k on both operands directly (no .T / XLU transpose).
    s = lax.dot_general(q_ref[0], k_ref[0],
                        dimension_numbers=(((1,), (1,)), ((), ())),
                        preferred_element_type=jnp.float32)            # (tq, tk)

    if masked:  # static flag: only emitted when S was padded up to S_pad
        col = ki * tk + lax.broadcasted_iota(jnp.int32, s.shape, 1)
        s = jnp.where(col < s_len, s, _MASK)

    # Online softmax update, kept in f32 on all generations.
    m_prev = m_sc[...]
    m_new = jnp.maximum(m_prev, jnp.max(s, axis=-1, keepdims=True))
    alpha = jnp.exp(m_prev - m_new)
    p = jnp.exp(s - m_new)
    l_sc[...] = alpha * l_sc[...] + jnp.sum(p, axis=-1, keepdims=True)
    acc_sc[...] = alpha * acc_sc[...] + jnp.dot(
        p.astype(v_ref.dtype), v_ref[0], preferred_element_type=jnp.float32)
    m_sc[...] = m_new

    @pl.when(ki == pl.num_programs(2) - 1)
    def _finalize():
        inv_l = pl.reciprocal(l_sc[...], approx=True)   # EUP slot, effectively free
        o_ref[0] = (acc_sc[...] * inv_l).astype(o_ref.dtype)


def _round_up(n, m):
    return ((n + m - 1) // m) * m


def _choose_tile(s, cap=256):
    """MXU-friendly tile: multiple of 8, <= cap.  Prefers 256 (v6e/v7x MXU width),
    falls back to 128 only when that wastes less sequence padding."""
    s8 = _round_up(s, 8)
    if s8 <= cap:
        return s8
    cands = [t for t in (256, 128) if t <= cap] or [cap]
    return min(cands, key=lambda t: (_round_up(s, t), -t))


def multiplicative_attention(x, wq, wk, wv, *, mm_dtype=jnp.bfloat16,
                             vmem_limit_bytes=None):
    """x: (B, S, d_model); wq/wk/wv: (d_model, d_k) -> (B, S, d_k).

    mm_dtype: MXU operand dtype (bf16 default for MXU peak; pass jnp.float32 for
    strict-f32 numerics).  Accumulation and softmax are always f32; output keeps
    x.dtype.
    """
    B, S, d_model = x.shape
    d_k = wq.shape[1]
    out_dtype = x.dtype
    dk_pad = _round_up(d_k, 128)            # lane-dense slices / stores
    scale = 1.0 / math.sqrt(d_k)            # scale uses the true d_k

    tile = _choose_tile(S, cap=256)
    S_pad = _round_up(S, tile)
    tq = tk = tile
    # Keep both v7x TensorCores fed on the "parallel" axes when B == 1.
    if B == 1:
        while S_pad // tq < 2 and tq % 16 == 0:
            tq //= 2
    n_q, n_k, n_s = S_pad // tq, S_pad // tk, S_pad // tile

    # Fuse (and zero-pad) the three projection matrices once, outside the kernels.
    # Zero dk-padding is exact: padded Q/K columns contribute 0 to scores; padded
    # V columns are dropped by the final slice.
    def _pad_w(w):
        w = w.astype(mm_dtype)
        return w if dk_pad == d_k else jnp.pad(w, ((0, 0), (0, dk_pad - d_k)))
    w_qkv = jnp.concatenate([_pad_w(wq), _pad_w(wk), _pad_w(wv)], axis=1)

    x_mm = x.astype(mm_dtype)
    if S_pad != S:
        x_mm = jnp.pad(x_mm, ((0, 0), (0, S_pad - S), (0, 0)))  # zero rows -> safe

    # ---------------- kernel 1: fused QKV projection (runs once over (B, S)) ----
    proj_kernel = functools.partial(_qkv_proj_kernel, dk_pad=dk_pad, scale=scale)
    qkv_shape = jax.ShapeDtypeStruct((B, S_pad, dk_pad), mm_dtype)
    q, k, v = pl.pallas_call(
        proj_kernel,
        out_shape=(qkv_shape, qkv_shape, qkv_shape),
        grid_spec=pltpu.PrefetchScalarGridSpec(
            num_scalar_prefetch=0,
            grid=(B, n_s),
            in_specs=[
                pl.BlockSpec((1, tile, d_model), lambda b, si: (b, si, 0)),
                # Constant block index -> DMA'd once, not per step.
                # (On v7x with very large d_model this block could additionally be
                #  single-buffered via pipeline_mode=pl.Buffered(1) to save VMEM.)
                pl.BlockSpec((d_model, 3 * dk_pad), lambda b, si: (0, 0)),
            ],
            out_specs=[
                pl.BlockSpec((1, tile, dk_pad), lambda b, si: (b, si, 0)),
                pl.BlockSpec((1, tile, dk_pad), lambda b, si: (b, si, 0)),
                pl.BlockSpec((1, tile, dk_pad), lambda b, si: (b, si, 0)),
            ],
        ),
        compiler_params=pltpu.CompilerParams(
            dimension_semantics=("parallel", "parallel"),
            vmem_limit_bytes=vmem_limit_bytes,
        ),
    )(x_mm, w_qkv)

    # ---------------- kernel 2: flash attention over precomputed Q/K/V ----------
    flash_kernel = functools.partial(
        _flash_attn_kernel, s_len=S, tk=tk, masked=(S_pad != S))
    out = pl.pallas_call(
        flash_kernel,
        out_shape=jax.ShapeDtypeStruct((B, S_pad, dk_pad), out_dtype),
        grid_spec=pltpu.PrefetchScalarGridSpec(
            num_scalar_prefetch=0,
            grid=(B, n_q, n_k),
            in_specs=[
                pl.BlockSpec((1, tq, dk_pad), lambda b, qi, ki: (b, qi, 0)),
                pl.BlockSpec((1, tk, dk_pad), lambda b, qi, ki: (b, ki, 0)),
                pl.BlockSpec((1, tk, dk_pad), lambda b, qi, ki: (b, ki, 0)),
            ],
            out_specs=pl.BlockSpec((1, tq, dk_pad), lambda b, qi, ki: (b, qi, 0)),
            scratch_shapes=[
                pltpu.VMEM((tq, 1), jnp.float32),        # running max
                pltpu.VMEM((tq, 1), jnp.float32),        # running denom
                pltpu.VMEM((tq, dk_pad), jnp.float32),   # output accumulator
            ],
        ),
        compiler_params=pltpu.CompilerParams(
            dimension_semantics=("parallel", "parallel", "arbitrary"),
            vmem_limit_bytes=vmem_limit_bytes,
        ),
    )(q, k, v)

    # Return the module's exact (B, S, d_k) view.  Consumers that can work with
    # the lane-dense padded (B, S_pad, dk_pad) layout should take `out` directly
    # (the slice below is an extra HBM pass) or pack multiple heads into dk_pad.
    if S_pad != S:
        out = out[:, :S, :]
    if dk_pad != d_k:
        out = out[:, :, :d_k]
    return out


def reference(x, wq, wk, wv):
    d_k = wq.shape[1]
    q = x @ wq
    k = x @ wk
    v = x @ wv
    scores = jnp.einsum("bqd,bkd->bqk", q, k) / jnp.sqrt(jnp.float32(d_k))
    return jax.nn.softmax(scores, axis=-1) @ v


if __name__ == "__main__":
    key = jax.random.PRNGKey(0)

    # (1) tiny full-extent blocks, (2) 256-wide MXU tiles, (3) pad-and-mask path.
    cases = [(2, 8, 32, 16), (2, 256, 128, 16), (2, 300, 64, 16)]
    for B, S, d_model, d_k in cases:
        kx, kq, kk, kv_ = jax.random.split(jax.random.fold_in(key, S), 4)
        x = jax.random.normal(kx, (B, S, d_model), dtype=jnp.float32)
        wq = jax.random.uniform(kq, (d_model, d_k), minval=-0.1, maxval=0.1,
                                dtype=jnp.float32)
        wk = jax.random.uniform(kk, (d_model, d_k), minval=-0.1, maxval=0.1,
                                dtype=jnp.float32)
        wv = jax.random.uniform(kv_, (d_model, d_k), minval=-0.1, maxval=0.1,
                                dtype=jnp.float32)
        ref = reference(x, wq, wk, wv)

        # Default path: bf16 MXU operands, f32 accumulation / softmax.
        out = jax.block_until_ready(multiplicative_attention(x, wq, wk, wv))
        assert out.shape == (B, S, d_k), f"bad shape {out.shape}"
        assert jnp.allclose(out, ref, atol=3e-2, rtol=3e-2), f"bf16 mismatch S={S}"

        # Strict-f32 opt-out path (tolerance: pl.reciprocal(approx=True) only).
        out32 = jax.block_until_ready(
            multiplicative_attention(x, wq, wk, wv, mm_dtype=jnp.float32))
        assert jnp.allclose(out32, ref, atol=2e-3, rtol=2e-3), f"f32 mismatch S={S}"

    print("KERNEL_OK")
</pallas_src>

<mosaic_0001>
module attributes {stable_mosaic.version = 11 : i64} {
  func.func @_qkv_proj_kernel(%arg0: i32, %arg1: i32, %arg2: memref<1x8x32xbf16, #tpu.memory_space<vmem>>, %arg3: memref<32x384xbf16, #tpu.memory_space<vmem>>, %arg4: memref<1x8x128xbf16, #tpu.memory_space<vmem>>, %arg5: memref<1x8x128xbf16, #tpu.memory_space<vmem>>, %arg6: memref<1x8x128xbf16, #tpu.memory_space<vmem>>) attributes {dimension_semantics = [#tpu.dimension_semantics<parallel>, #tpu.dimension_semantics<parallel>], iteration_bounds = array<i64: 2, 1>, scalar_prefetch = 0 : i64, scratch_operands = 0 : i64, tpu.core_type = #tpu.core_type<tc>, window_params = [{transform_indices = @transform_0, window_bounds = array<i64: 1, 8, 32>}, {pipeline_mode = #tpu.pipeline_mode<synchronous>, transform_indices = @transform_1, window_bounds = array<i64: 32, 384>}, {transform_indices = @transform_2, window_bounds = array<i64: 1, 8, 128>}, {transform_indices = @transform_3, window_bounds = array<i64: 1, 8, 128>}, {transform_indices = @transform_4, window_bounds = array<i64: 1, 8, 128>}]} {
    %c0 = arith.constant 0 : index
    %c0_0 = arith.constant 0 : index
    %c0_1 = arith.constant 0 : index
    %0 = vector.load %arg2[%c0, %c0_0, %c0_1] : memref<1x8x32xbf16, #tpu.memory_space<vmem>>, vector<1x8x32xbf16>
    %1 = vector.shape_cast %0 : vector<1x8x32xbf16> to vector<8x32xbf16>
    %c0_2 = arith.constant 0 : index
    %c0_3 = arith.constant 0 : index
    %2 = vector.load %arg3[%c0_2, %c0_3] : memref<32x384xbf16, #tpu.memory_space<vmem>>, vector<32x384xbf16>
    %cst = arith.constant dense<0.000000e+00> : vector<8x384xf32>
    %3 = tpu.matmul %1, %2, %cst {dimension_numbers = #tpu.dot_dimension_numbers<[1], [0], [0], [1], [0, 0, 1, 1], [], []>} : vector<8x32xbf16>, vector<32x384xbf16>, vector<8x384xf32> -> vector<8x384xf32>
    %4 = vector.extract_strided_slice %3 {offsets = [0, 0], sizes = [8, 128], strides = [1, 1]} : vector<8x384xf32> to vector<8x128xf32>
    %cst_4 = arith.constant 2.500000e-01 : f32
    %5 = vector.broadcast %cst_4 : f32 to vector<8x128xf32>
    %6 = arith.mulf %4, %5 : vector<8x128xf32>
    %7 = arith.truncf %6 : vector<8x128xf32> to vector<8x128xbf16>
    %c0_5 = arith.constant 0 : index
    %c0_6 = arith.constant 0 : index
    %c0_7 = arith.constant 0 : index
    %8 = vector.load %arg4[%c0_5, %c0_6, %c0_7] : memref<1x8x128xbf16, #tpu.memory_space<vmem>>, vector<1x8x128xbf16>
    %9 = vector.shape_cast %8 : vector<1x8x128xbf16> to vector<8x128xbf16>
    %10 = vector.shape_cast %7 : vector<8x128xbf16> to vector<1x8x128xbf16>
    tpu.vector_store %arg4[%c0_5, %c0_6, %c0_7], %10 {strides = array<i32>} : memref<1x8x128xbf16, #tpu.memory_space<vmem>>, vector<1x8x128xbf16>,
    %11 = vector.extract_strided_slice %3 {offsets = [0, 128], sizes = [8, 128], strides = [1, 1]} : vector<8x384xf32> to vector<8x128xf32>
    %12 = arith.truncf %11 : vector<8x128xf32> to vector<8x128xbf16>
    %c0_8 = arith.constant 0 : index
    %c0_9 = arith.constant 0 : index
    %c0_10 = arith.constant 0 : index
    %13 = vector.load %arg5[%c0_8, %c0_9, %c0_10] : memref<1x8x128xbf16, #tpu.memory_space<vmem>>, vector<1x8x128xbf16>
    %14 = vector.shape_cast %13 : vector<1x8x128xbf16> to vector<8x128xbf16>
    %15 = vector.shape_cast %12 : vector<8x128xbf16> to vector<1x8x128xbf16>
    tpu.vector_store %arg5[%c0_8, %c0_9, %c0_10], %15 {strides = array<i32>} : memref<1x8x128xbf16, #tpu.memory_space<vmem>>, vector<1x8x128xbf16>,
    %16 = vector.extract_strided_slice %3 {offsets = [0, 256], sizes = [8, 128], strides = [1, 1]} : vector<8x384xf32> to vector<8x128xf32>
    %17 = arith.truncf %16 : vector<8x128xf32> to vector<8x128xbf16>
    %c0_11 = arith.constant 0 : index
    %c0_12 = arith.constant 0 : index
    %c0_13 = arith.constant 0 : index
    %18 = vector.load %arg6[%c0_11, %c0_12, %c0_13] : memref<1x8x128xbf16, #tpu.memory_space<vmem>>, vector<1x8x128xbf16>
    %19 = vector.shape_cast %18 : vector<1x8x128xbf16> to vector<8x128xbf16>
    %20 = vector.shape_cast %17 : vector<8x128xbf16> to vector<1x8x128xbf16>
    tpu.vector_store %arg6[%c0_11, %c0_12, %c0_13], %20 {strides = array<i32>} : memref<1x8x128xbf16, #tpu.memory_space<vmem>>, vector<1x8x128xbf16>,
    return
  }
  func.func @transform_0(%arg0: i32, %arg1: i32) -> (i32, i32, i32) {
    %c0_i32 = arith.constant 0 : i32
    %c0_i32_0 = arith.constant 0 : i32
    return %arg0, %arg1, %c0_i32 : i32, i32, i32
  }
  func.func @transform_1(%arg0: i32, %arg1: i32) -> (i32, i32) {
    %c0_i32 = arith.constant 0 : i32
    %c0_i32_0 = arith.constant 0 : i32
    %c0_i32_1 = arith.constant 0 : i32
    return %c0_i32, %c0_i32_0 : i32, i32
  }
  func.func @transform_2(%arg0: i32, %arg1: i32) -> (i32, i32, i32) {
    %c0_i32 = arith.constant 0 : i32
    %c0_i32_0 = arith.constant 0 : i32
    return %arg0, %arg1, %c0_i32 : i32, i32, i32
  }
  func.func @transform_3(%arg0: i32, %arg1: i32) -> (i32, i32, i32) {
    %c0_i32 = arith.constant 0 : i32
    %c0_i32_0 = arith.constant 0 : i32
    return %arg0, %arg1, %c0_i32 : i32, i32, i32
  }
  func.func @transform_4(%arg0: i32, %arg1: i32) -> (i32, i32, i32) {
    %c0_i32 = arith.constant 0 : i32
    %c0_i32_0 = arith.constant 0 : i32
    return %arg0, %arg1, %c0_i32 : i32, i32, i32
  }
}

</mosaic_0001>

<llo_original>
// kernel: tpu_custom_call.1
$region0: #{tpu_custom_call.1}
  #allocation0 [shape = 'u32[]', space=smem, size = 0x4, offset = 0x4, fixed_abs, tag = 'smem constant byte address 0x4 - core index']
  #allocation1 [shape = 'u32[144,128]{1,0:T(1,128)}', space=vmem, size = 0x12000, scoped, tag = 'internal scratch']
  %s0 = inlined_call_operand.hbm [shape: bf16[2,8,32], index: 0, kind: input, shape index: {}]
  %s1 = inlined_call_operand.hbm [shape: bf16[32,384], index: 1, kind: input, shape index: {}]
  %s2 = inlined_call_operand.hbm [shape: bf16[2,8,128], index: 2, kind: output, shape index: {0}]
  %s3 = inlined_call_operand.hbm [shape: bf16[2,8,128], index: 3, kind: output, shape index: {1}]
  %s4 = inlined_call_operand.hbm [shape: bf16[2,8,128], index: 4, kind: output, shape index: {2}]
  %5 = xla_tuple %s2, %s3, %s4
  %s6 = sld [smem:[#allocation0]]
  $region65: #{tpu_custom_call.1} parent=0
    _
  %s8 = ssub.s32 1, %s6
  %s9 = scalar_select 0, %s8, %s6
  $region1: #{tpu_custom_call.1} parent=0
    #allocation2 [shape = 'u8[4096]{0}', space=vmem, size = 0x1000, scoped, tag = 'input window, operand 0']
    #allocation3 [shape = 's32[2]{0}', space=sflag, size = 0x8, scoped, tag = 'scoped memory for tpu_custom_call.1']
    #allocation4 [shape = 's32[2]{0}', space=sflag, size = 0x8, scoped, tag = 'scoped memory for tpu_custom_call.1']
    #allocation5 [shape = 'u8[24576]{0}', space=vmem, size = 0x6000, scoped, tag = 'input window, operand 1, single buffered']
    #allocation6 [shape = 's32[1]{0}', space=sflag, size = 0x4, scoped, tag = 'scoped memory for tpu_custom_call.1']
    #allocation7 [shape = 'u8[4096]{0}', space=vmem, size = 0x1000, scoped, tag = 'output window, operand 0']
    #allocation8 [shape = 'u8[4096]{0}', space=vmem, size = 0x1000, scoped, tag = 'output window, operand 1']
    #allocation9 [shape = 's32[2]{0}', space=sflag, size = 0x8, scoped, tag = 'scoped memory for tpu_custom_call.1']
    #allocation10 [shape = 'u8[4096]{0}', space=vmem, size = 0x1000, scoped, tag = 'output window, operand 2']
    %10 = vsyncpa [#allocation3], 0
    %s11 = scalar_lea.sflag [#allocation3], 1
    %12 = vsyncpa %s11, 0
    %13 = vsyncpa [#allocation6], 0
    %14 = vsyncpa [#allocation4], 0
    %s15 = scalar_lea.sflag [#allocation4], 1
    %16 = vsyncpa %s15, 0
    %17 = vsyncpa [#allocation9], 0
    %s18 = scalar_lea.sflag [#allocation9], 1
    %19 = vsyncpa %s18, 0
    loop: start=0, step=1, limit=4
    $region2: #{tpu_custom_call.1} parent=1 // loop_pre_header
      _
    $region3: #{tpu_custom_call.1} parent=1 // loop_header
      %s21 = sphi 0, %s25
      %p22 = scmp.ge.s32.totalorder %s21, 4
      %s28 = sphi 0, %s40
      %s29 = sphi 0, %s36
      %s30 = sphi 0, %s28
      %s31 = sphi 0, %s29
      %s32 = sphi 0, %s30
      %s33 = sphi 0, %s31
      %s45 = sphi 0, %s47
      %s48 = sphi 0, %s45
      %s49 = sphi 0, %s48
      %s65 = sphi 0, %s49
      %s69 = sphi 0, %s69
      %s71 = sphi 0, %s69
      %s72 = sphi 0, %s71
      %s86 = sphi 0, %s72
      %s94 = sphi 0, %s96
      %s97 = sphi 0, %s94
      %s98 = sphi 0, %s97
      %s114 = sphi 0, %s98
      %s122 = sphi 0, %s124
      %s125 = sphi 0, %s122
      %s126 = sphi 0, %s125
      %s142 = sphi 0, %s126
      %s150 = sphi 0, %s152
      %s153 = sphi 0, %s150
      %s154 = sphi 0, %s153
      %s170 = sphi 0, %s154
    $region4: #{tpu_custom_call.1} parent=1 // loop_header_branch
      %24 = sbr.rel (%p22) target = $region8
    $region5: #{tpu_custom_call.1} parent=1 // loop_body
      %s26 = ssub.s32 %s21, 1
      %s27 = ssub.s32 %s21, 2
      %s34 = sadd.s32 1, %s29
      %p35 = scmp.ge.s32.totalorder %s34, 1
      %s36 = scalar_select %p35, 0, %s34
      %s37 = sadd.s32 1, %s28
      %s38 = scalar_select %p35, %s37, %s28
      %p39 = scmp.ge.s32.totalorder %s38, 2
      %s40 = scalar_select %p39, 0, %s38
      %s41 = ssub.s32 %s28, %s40
      %s42 = ssub.s32 %s29, %s36
      %s43 = sor.u32 %s41, %s42
      %p44 = scmp.eq.s32.totalorder %s43, 0
      %s46 = sadd.s32 %s45, 1
      %s47 = scalar_select %p44, %s45, %s46
      %p50 = pneg %p44
      %p51 = scmp.eq.s32.totalorder %s21, 1
      %p52 = por %p50, %p51
      %p53 = scmp.ne.s32.totalorder %s45, %s48
      %p54 = scmp.eq.s32.totalorder %s21, 0
      %p55 = por %p53, %p54
      %p56 = scmp.ne.s32.totalorder %s45, %s48
      %p57 = scmp.eq.s32.totalorder %s26, 1
      %p58 = por %p56, %p57
      %p59 = scmp.ne.s32.totalorder %s48, %s49
      %p60 = scmp.eq.s32.totalorder %s26, 0
      %p61 = por %p59, %p60
      %p62 = scmp.ne.s32.totalorder %s48, %s49
      %p63 = scmp.eq.s32.totalorder %s27, 1
      %p64 = por %p62, %p63
      %p66 = scmp.ne.s32.totalorder %s49, %s65
      %p67 = scmp.eq.s32.totalorder %s27, 0
      %p68 = por %p66, %p67
      %s70 = sadd.s32 %s69, 1
      %p73 = scmp.eq.s32.totalorder %s21, 1
      %p74 = scmp.ne.s32.totalorder %s69, %s71
      %p75 = scmp.eq.s32.totalorder %s21, 0
      %p76 = por %p74, %p75
      %p77 = scmp.ne.s32.totalorder %s69, %s71
      %p78 = scmp.eq.s32.totalorder %s26, 1
      %p79 = por %p77, %p78
      %p80 = scmp.ne.s32.totalorder %s71, %s72
      %p81 = scmp.eq.s32.totalorder %s26, 0
      %p82 = por %p80, %p81
      %p83 = scmp.ne.s32.totalorder %s71, %s72
      %p84 = scmp.eq.s32.totalorder %s27, 1
      %p85 = por %p83, %p84
      %p87 = scmp.ne.s32.totalorder %s72, %s86
      %p88 = scmp.eq.s32.totalorder %s27, 0
      %p89 = por %p87, %p88
      %s90 = ssub.s32 %s28, %s40
      %s91 = ssub.s32 %s29, %s36
      %s92 = sor.u32 %s90, %s91
      %p93 = scmp.eq.s32.totalorder %s92, 0
      %s95 = sadd.s32 %s94, 1
      %s96 = scalar_select %p93, %s94, %s95
      %p99 = pneg %p93
      %p100 = scmp.eq.s32.totalorder %s21, 1
      %p101 = por %p99, %p100
      %p102 = scmp.ne.s32.totalorder %s94, %s97
      %p103 = scmp.eq.s32.totalorder %s21, 0
      %p104 = por %p102, %p103
      %p105 = scmp.ne.s32.totalorder %s94, %s97
      %p106 = scmp.eq.s32.totalorder %s26, 1
      %p107 = por %p105, %p106
      %p108 = scmp.ne.s32.totalorder %s97, %s98
      %p109 = scmp.eq.s32.totalorder %s26, 0
      %p110 = por %p108, %p109
      %p111 = scmp.ne.s32.totalorder %s97, %s98
      %p112 = scmp.eq.s32.totalorder %s27, 1
      %p113 = por %p111, %p112
      %p115 = scmp.ne.s32.totalorder %s98, %s114
      %p116 = scmp.eq.s32.totalorder %s27, 0
      %p117 = por %p115, %p116
      %s118 = ssub.s32 %s28, %s40
      %s119 = ssub.s32 %s29, %s36
      %s120 = sor.u32 %s118, %s119
      %p121 = scmp.eq.s32.totalorder %s120, 0
      %s123 = sadd.s32 %s122, 1
      %s124 = scalar_select %p121, %s122, %s123
      %p127 = pneg %p121
      %p128 = scmp.eq.s32.totalorder %s21, 1
      %p129 = por %p127, %p128
      %p130 = scmp.ne.s32.totalorder %s122, %s125
      %p131 = scmp.eq.s32.totalorder %s21, 0
      %p132 = por %p130, %p131
      %p133 = scmp.ne.s32.totalorder %s122, %s125
      %p134 = scmp.eq.s32.totalorder %s26, 1
      %p135 = por %p133, %p134
      %p136 = scmp.ne.s32.totalorder %s125, %s126
      %p137 = scmp.eq.s32.totalorder %s26, 0
      %p138 = por %p136, %p137
      %p139 = scmp.ne.s32.totalorder %s125, %s126
      %p140 = scmp.eq.s32.totalorder %s27, 1
      %p141 = por %p139, %p140
      %p143 = scmp.ne.s32.totalorder %s126, %s142
      %p144 = scmp.eq.s32.totalorder %s27, 0
      %p145 = por %p143, %p144
      %s146 = ssub.s32 %s28, %s40
      %s147 = ssub.s32 %s29, %s36
      %s148 = sor.u32 %s146, %s147
      %p149 = scmp.eq.s32.totalorder %s148, 0
      %s151 = sadd.s32 %s150, 1
      %s152 = scalar_select %p149, %s150, %s151
      %p155 = pneg %p149
      %p156 = scmp.eq.s32.totalorder %s21, 1
      %p157 = por %p155, %p156
      %p158 = scmp.ne.s32.totalorder %s150, %s153
      %p159 = scmp.eq.s32.totalorder %s21, 0
      %p160 = por %p158, %p159
      %p161 = scmp.ne.s32.totalorder %s150, %s153
      %p162 = scmp.eq.s32.totalorder %s26, 1
      %p163 = por %p161, %p162
      %p164 = scmp.ne.s32.totalorder %s153, %s154
      %p165 = scmp.eq.s32.totalorder %s26, 0
      %p166 = por %p164, %p165
      %p167 = scmp.ne.s32.totalorder %s153, %s154
      %p168 = scmp.eq.s32.totalorder %s27, 1
      %p169 = por %p167, %p168
      %p171 = scmp.ne.s32.totalorder %s154, %s170
      %p172 = scmp.eq.s32.totalorder %s27, 0
      %p173 = por %p171, %p172
      %p174 = scmp.le.s32.totalorder 1, %s21
      %p175 = scmp.lt.s32.totalorder %s21, 3
      %p176 = pnand %p174, %p175
      %p177 = pneg %p176
      // Predicated region
      $region9: #{tpu_custom_call.1} parent=5 // pred_check
        _
      $region10: #{tpu_custom_call.1} parent=5 // pred_check_branch
        %179 = sbr.rel (%p176) target = $region12
      $region11: #{tpu_custom_call.1} parent=5 // pred_region
        %s180 = ssub.s32 %s21, 1
        // Predicated region
        $region13: #{tpu_custom_call.1} parent=11 // pred_check
          %p181 = pneg %p82
        $region14: #{tpu_custom_call.1} parent=11 // pred_check_branch
          %183 = sbr.rel (%p181) target = $region16
        $region15: #{tpu_custom_call.1} parent=11 // pred_region
          %s185 = ssub.s32 768, 768
          %186 = vsyncadd [#allocation6], %s185
          %s187 = sshll.u32 [#allocation5], 4
          %s188 = int_to_ptr.vmem [resolvable:$true] %s187
          %193 = dma.hbm_to_vmem [thread:$0]  %s1, 768, %s188, [#allocation6], 192, 192, 12
        $region16: #{tpu_custom_call.1} parent=11 // pred_fallthru
          _
      $region12: #{tpu_custom_call.1} parent=5 // pred_fallthru
        _
      %p194 = scmp.lt.s32.totalorder %s21, 2
      // Predicated region
      $region17: #{tpu_custom_call.1} parent=5 // pred_check
        %p195 = pneg %p194
      $region18: #{tpu_custom_call.1} parent=5 // pred_check_branch
        %197 = sbr.rel (%p195) target = $region20
      $region19: #{tpu_custom_call.1} parent=5 // pred_region
        // Predicated region
        $region21: #{tpu_custom_call.1} parent=19 // pred_check
          %p198 = pneg %p55
        $region22: #{tpu_custom_call.1} parent=19 // pred_check_branch
          %200 = sbr.rel (%p198) target = $region24
        $region23: #{tpu_custom_call.1} parent=19 // pred_region
          %s201 = sand.u32 %s45, 1
          %s202 = scalar_lea.sflag [#allocation3], %s201
          %s203 = sand.u32 %s45, 1
          %s204 = smul.addr %s203, 4
          %s205 = scalar_lea.vmem [#allocation2], %s204
          %s207 = ssub.s32 64, 64
          %208 = vsyncadd %s202, %s207
          %s209 = sadd.s32 %s29, %s28
          %s210 = smul.addr %s209, 64
          %s211 = scalar_lea.hbm %s0, %s210
          %s213 = sshll.u32 %s205, 4
          %s214 = int_to_ptr.vmem [resolvable:$true] %s213
          %216 = dma.hbm_to_vmem [thread:$0]  %s211, 64, %s214, %s202
        $region24: #{tpu_custom_call.1} parent=19 // pred_fallthru
          _
      $region20: #{tpu_custom_call.1} parent=5 // pred_fallthru
        _
      %p217 = scmp.le.s32.totalorder 1, %s21
      %p218 = scmp.lt.s32.totalorder %s21, 3
      %p219 = pnand %p217, %p218
      %p220 = pneg %p219
      // Predicated region
      $region25: #{tpu_custom_call.1} parent=5 // pred_check
        _
      $region26: #{tpu_custom_call.1} parent=5 // pred_check_branch
        %222 = sbr.rel (%p219) target = $region28
      $region27: #{tpu_custom_call.1} parent=5 // pred_region
        %s223 = ssub.s32 %s21, 1
        %s224 = sand.u32 %s48, 1
        %s225 = scalar_lea.sflag [#allocation3], %s224
        %s226 = sand.u32 %s48, 1
        %s227 = smul.addr %s226, 4
        %s228 = scalar_lea.vmem [#allocation2], %s227
        // Predicated region
        $region29: #{tpu_custom_call.1} parent=27 // pred_check
          %p229 = pneg %p61
        $region30: #{tpu_custom_call.1} parent=27 // pred_check_branch
          %231 = sbr.rel (%p229) target = $region32
        $region31: #{tpu_custom_call.1} parent=27 // pred_region
          %232 = dma.done %s225, 64
        $region32: #{tpu_custom_call.1} parent=27 // pred_fallthru
          _
        // Predicated region
        $region33: #{tpu_custom_call.1} parent=27 // pred_check
          %p233 = pneg %p82
        $region34: #{tpu_custom_call.1} parent=27 // pred_check_branch
          %235 = sbr.rel (%p233) target = $region36
        $region35: #{tpu_custom_call.1} parent=27 // pred_region
          %236 = dma.done [#allocation6], 768
        $region36: #{tpu_custom_call.1} parent=27 // pred_fallthru
          _
        %s237 = sand.u32 %s48, 1
        %s238 = scalar_lea.sflag [#allocation3], %s237
        %s239 = sand.u32 %s48, 1
        %s240 = smul.addr %s239, 4
        %s241 = scalar_lea.vmem [#allocation2], %s240
        %p242 = pneg %p61
        %p243 = pneg %p58
        %p244 = pneg %p82
        %p245 = pneg %p79
        %p246 = pneg %p110
        %p247 = pneg %p107
        %s248 = sand.u32 %s97, 1
        %s249 = scalar_lea.sflag [#allocation4], %s248
        %s250 = sand.u32 %s97, 1
        %s251 = smul.addr %s250, 4
        %s252 = scalar_lea.vmem [#allocation7], %s251
        %p253 = pneg %p138
        %p254 = pneg %p135
        %s255 = sand.u32 %s26, 1
        %s256 = scalar_lea.sflag [#allocation9], %s255
        %s257 = sand.u32 %s125, 1
        %s258 = smul.addr %s257, 4
        %s259 = scalar_lea.vmem [#allocation8], %s258
        %p260 = pneg %p166
        %p261 = pneg %p163
        %s262 = sand.u32 %s26, 1
        %s263 = scalar_lea.sflag [#allocation9], %s262
        %s264 = sand.u32 %s153, 1
        %s265 = smul.addr %s264, 4
        %s266 = scalar_lea.vmem [#allocation10], %s265
        %v268 = vld [vmem:[%s228] sm:$0xf]
        %v269 = vld [vmem:[#allocation5] sm:$0xff]
        %v270 = vld [vmem:[#allocation5 + $0x8] sm:$0xf]
        %v271 = vld [vmem:[#allocation5 + $0xc] sm:$0xff]
        %v272 = vld [vmem:[#allocation5 + $0x14] sm:$0xf]
        %v273 = vld [vmem:[#allocation5 + $0x18] sm:$0xff]
        %v274 = vld [vmem:[#allocation5 + $0x20] sm:$0xf]
        %v275 = vld [vmem:[#allocation5 + $0x24] sm:$0xff]
        %v276 = vld [vmem:[#allocation5 + $0x2c] sm:$0xf]
        %v285 = vunpack.c.l.b16 %v269
        %v286 = vunpack.c.h.b16 %v269
        %v287 = vunpack.c.l.b16 %v270
        %v288 = vunpack.c.l.b16 %v271
        %v289 = vunpack.c.h.b16 %v271
        %v290 = vunpack.c.l.b16 %v272
        %v291 = vunpack.c.l.b16 %v273
        %v292 = vunpack.c.h.b16 %v273
        %v293 = vunpack.c.l.b16 %v274
        %v294 = vunpack.c.l.b16 %v275
        %v295 = vunpack.c.h.b16 %v275
        %v296 = vunpack.c.l.b16 %v276
        %v297 = vpack.c.b16 %v288, %v285
        %v298 = vpack.c.b16 %v289, %v286
        %v299 = vpack.c.b16 %v290, %v287
        %v300 = vpack.c.b16 %v294, %v291
        %v301 = vpack.c.b16 %v295, %v292
        %v302 = vpack.c.b16 %v296, %v293
        %vm309 = vcmask 261120
        %v311 = vsel %vm309, %v268, 0
        %313 = vmatprep.subr.bf16.mxu0 %v298
        %314 = vmatpush1.bf16.msra.mxu0 %v297
        %315 = vmatprep.subr.bf16.mxu0 %v301
        %316 = vmatpush1.bf16.msra.mxu0 %v300
        %317 = vmatprep.subr.bf16.mxu0 0
        %318 = vmatpush1.bf16.msra.mxu0 0
        %319 = vmatprep.subr.bf16.mxu0 0
        %320 = vmatpush1.bf16.msra.mxu0 0
        %321 = vmatprep.subr.bf16.mxu0 0
        %322 = vmatpush1.bf16.msra.mxu0 0
        %323 = vmatprep.subr.bf16.mxu0 0
        %324 = vmatpush1.bf16.msra.mxu0 0
        %325 = vmatprep.subr.bf16.mxu0 0
        %326 = vmatpush1.bf16.msra.mxu0 0
        %327 = vmatprep.subr.bf16.mxu0 0
        %328 = vmatpush1.bf16.msra.mxu0 0
        %329 = vmatprep.subr.bf16.mxu0 0
        %330 = vmatpush1.bf16.msra.mxu0 0
        %331 = vmatprep.subr.bf16.mxu0 0
        %332 = vmatpush1.bf16.msra.mxu0 0
        %333 = vmatprep.subr.bf16.mxu0 0
        %334 = vmatpush1.bf16.msra.mxu0 0
        %335 = vmatprep.subr.bf16.mxu0 0
        %336 = vmatpush1.bf16.msra.mxu0 0
        %337 = vmatprep.subr.bf16.mxu0 0
        %338 = vmatpush1.bf16.msra.mxu0 0
        %339 = vmatprep.subr.bf16.mxu0 0
        %340 = vmatpush1.bf16.msra.mxu0 0
        %341 = vmatprep.subr.bf16.mxu0 0
        %342 = vmatpush1.bf16.msra.mxu0 0
        %343 = vmatprep.subr.bf16.mxu0 0
        %344 = vmatpush1.bf16.msra.mxu0 0
        %345 = vmatprep.mubr.bf16.mxu0 0
        %346 = vmatmul.mubr.bf16.gmra.mrb[0].mxu0 %v311
        %v347 = vpop.f32.mrb[0].mxu0
        %v348 = vadd.f32 0.0, %v347
        %v349 = vpop.f32.mrb[0].mxu0
        %v350 = vadd.f32 0.0, %v349
        %v351 = vpop.f32.mrb[0].mxu0
        %v352 = vpop.f32.mrb[0].mxu0
        %353 = vdwg.mxu0
        %354 = vmatprep.subr.bf16.mxu0 0
        %355 = vmatpush1.bf16.msra.mxu0 %v299
        %356 = vmatprep.subr.bf16.mxu0 0
        %357 = vmatpush1.bf16.msra.mxu0 %v302
        %358 = vmatprep.subr.bf16.mxu0 0
        %359 = vmatpush1.bf16.msra.mxu0 0
        %360 = vmatprep.subr.bf16.mxu0 0
        %361 = vmatpush1.bf16.msra.mxu0 0
        %362 = vmatprep.subr.bf16.mxu0 0
        %363 = vmatpush1.bf16.msra.mxu0 0
        %364 = vmatprep.subr.bf16.mxu0 0
        %365 = vmatpush1.bf16.msra.mxu0 0
        %366 = vmatprep.subr.bf16.mxu0 0
        %367 = vmatpush1.bf16.msra.mxu0 0
        %368 = vmatprep.subr.bf16.mxu0 0
        %369 = vmatpush1.bf16.msra.mxu0 0
        %370 = vmatprep.subr.bf16.mxu0 0
        %371 = vmatpush1.bf16.msra.mxu0 0
        %372 = vmatprep.subr.bf16.mxu0 0
        %373 = vmatpush1.bf16.msra.mxu0 0
        %374 = vmatprep.subr.bf16.mxu0 0
        %375 = vmatpush1.bf16.msra.mxu0 0
        %376 = vmatprep.subr.bf16.mxu0 0
        %377 = vmatpush1.bf16.msra.mxu0 0
        %378 = vmatprep.subr.bf16.mxu0 0
        %379 = vmatpush1.bf16.msra.mxu0 0
        %380 = vmatprep.subr.bf16.mxu0 0
        %381 = vmatpush1.bf16.msra.mxu0 0
        %382 = vmatprep.subr.bf16.mxu0 0
        %383 = vmatpush1.bf16.msra.mxu0 0
        %384 = vmatprep.subr.bf16.mxu0 0
        %385 = vmatpush1.bf16.msra.mxu0 0
        %386 = vmatprep.mubr.bf16.mxu0 0
        %387 = vmatmul.mubr.bf16.gmra.mrb[0].mxu0 %v311
        %v388 = vpop.f32.mrb[0].mxu0
        %v389 = vadd.f32 0.0, %v388
        %v390 = vpop.f32.mrb[0].mxu0
        %v391 = vpop.f32.mrb[0].mxu0
        %v392 = vpop.f32.mrb[0].mxu0
        %393 = vdwg.mxu0
        %v394 = vmul.f32 %v348, 0.25
        %v395 = vpack.c.bf16 %v394, %v394
        %396 = vst [vmem:[%s252] sm:$0xf] %v395
        %v397 = vpack.c.bf16 %v350, %v350
        %398 = vst [vmem:[%s259] sm:$0xf] %v397
        %v399 = vpack.c.bf16 %v389, %v389
        %400 = vst [vmem:[%s266] sm:$0xf] %v399
        %s401 = sand.u32 %s97, 1
        %s402 = scalar_lea.sflag [#allocation4], %s401
        %s403 = sand.u32 %s97, 1
        %s404 = smul.addr %s403, 4
        %s405 = scalar_lea.vmem [#allocation7], %s404
        %s406 = sand.u32 %s26, 1
        %s407 = scalar_lea.sflag [#allocation9], %s406
        %s408 = sand.u32 %s125, 1
        %s409 = smul.addr %s408, 4
        %s410 = scalar_lea.vmem [#allocation8], %s409
        %s411 = sand.u32 %s26, 1
        %s412 = scalar_lea.sflag [#allocation9], %s411
        %s413 = sand.u32 %s153, 1
        %s414 = smul.addr %s413, 4
        %s415 = scalar_lea.vmem [#allocation10], %s414
        // Predicated region
        $region37: #{tpu_custom_call.1} parent=27 // pred_check
          %p416 = pneg %p107
        $region38: #{tpu_custom_call.1} parent=27 // pred_check_branch
          %418 = sbr.rel (%p416) target = $region40
        $region39: #{tpu_custom_call.1} parent=27 // pred_region
          %s420 = ssub.s32 64, 64
          %421 = vsyncadd %s402, %s420
          %s422 = sadd.s32 %s31, %s30
          %s423 = smul.addr %s422, 64
          %s424 = scalar_lea.hbm %s2, %s423
          %s426 = sshll.u32 %s405, 4
          %s427 = int_to_ptr.vmem [resolvable:$true] %s426
          %429 = dma.vmem_to_hbm [thread:$0]  %s427, 64, %s424, %s402
        $region40: #{tpu_custom_call.1} parent=27 // pred_fallthru
          _
        // Predicated region
        $region41: #{tpu_custom_call.1} parent=27 // pred_check
          %p430 = pneg %p135
        $region42: #{tpu_custom_call.1} parent=27 // pred_check_branch
          %432 = sbr.rel (%p430) target = $region44
        $region43: #{tpu_custom_call.1} parent=27 // pred_region
          %s434 = ssub.s32 64, 64
          %435 = vsyncadd %s407, %s434
          %s436 = sadd.s32 %s31, %s30
          %s437 = smul.addr %s436, 64
          %s438 = scalar_lea.hbm %s3, %s437
          %s440 = sshll.u32 %s410, 4
          %s441 = int_to_ptr.vmem [resolvable:$true] %s440
          %443 = dma.vmem_to_hbm [thread:$0]  %s441, 64, %s438, %s407
        $region44: #{tpu_custom_call.1} parent=27 // pred_fallthru
          _
        // Predicated region
        $region45: #{tpu_custom_call.1} parent=27 // pred_check
          %p444 = pneg %p163
        $region46: #{tpu_custom_call.1} parent=27 // pred_check_branch
          %446 = sbr.rel (%p444) target = $region48
        $region47: #{tpu_custom_call.1} parent=27 // pred_region
          %s448 = ssub.s32 64, 64
          %449 = vsyncadd %s412, %s448
          %s450 = sadd.s32 %s31, %s30
          %s451 = smul.addr %s450, 64
          %s452 = scalar_lea.hbm %s4, %s451
          %s454 = sshll.u32 %s415, 4
          %s455 = int_to_ptr.vmem [resolvable:$true] %s454
          %457 = dma.vmem_to_hbm [thread:$0]  %s455, 64, %s452, %s412
        $region48: #{tpu_custom_call.1} parent=27 // pred_fallthru
          _
      $region28: #{tpu_custom_call.1} parent=5 // pred_fallthru
        _
      %p458 = scmp.le.s32.totalorder 2, %s21
      // Predicated region
      $region49: #{tpu_custom_call.1} parent=5 // pred_check
        %p459 = pneg %p458
      $region50: #{tpu_custom_call.1} parent=5 // pred_check_branch
        %461 = sbr.rel (%p459) target = $region52
      $region51: #{tpu_custom_call.1} parent=5 // pred_region
        %s462 = ssub.s32 %s21, 2
        // Predicated region
        $region53: #{tpu_custom_call.1} parent=51 // pred_check
          %p463 = pneg %p113
        $region54: #{tpu_custom_call.1} parent=51 // pred_check_branch
          %465 = sbr.rel (%p463) target = $region56
        $region55: #{tpu_custom_call.1} parent=51 // pred_region
          %s466 = sand.u32 %s98, 1
          %s467 = scalar_lea.sflag [#allocation4], %s466
          %s468 = sand.u32 %s98, 1
          %s469 = smul.addr %s468, 4
          %s470 = scalar_lea.vmem [#allocation7], %s469
          %471 = dma.done %s467, 64
        $region56: #{tpu_custom_call.1} parent=51 // pred_fallthru
          _
        // Predicated region
        $region57: #{tpu_custom_call.1} parent=51 // pred_check
          %p472 = pneg %p141
        $region58: #{tpu_custom_call.1} parent=51 // pred_check_branch
          %474 = sbr.rel (%p472) target = $region60
        $region59: #{tpu_custom_call.1} parent=51 // pred_region
          %s475 = sand.u32 %s27, 1
          %s476 = scalar_lea.sflag [#allocation9], %s475
          %s477 = sand.u32 %s126, 1
          %s478 = smul.addr %s477, 4
          %s479 = scalar_lea.vmem [#allocation8], %s478
          %480 = dma.done %s476, 64
        $region60: #{tpu_custom_call.1} parent=51 // pred_fallthru
          _
        // Predicated region
        $region61: #{tpu_custom_call.1} parent=51 // pred_check
          %p481 = pneg %p169
        $region62: #{tpu_custom_call.1} parent=51 // pred_check_branch
          %483 = sbr.rel (%p481) target = $region64
        $region63: #{tpu_custom_call.1} parent=51 // pred_region
          %s484 = sand.u32 %s27, 1
          %s485 = scalar_lea.sflag [#allocation9], %s484
          %s486 = sand.u32 %s154, 1
          %s487 = smul.addr %s486, 4
          %s488 = scalar_lea.vmem [#allocation10], %s487
          %489 = dma.done %s485, 64
        $region64: #{tpu_custom_call.1} parent=51 // pred_fallthru
          _
      $region52: #{tpu_custom_call.1} parent=5 // pred_fallthru
        _
    $region6: #{tpu_custom_call.1} parent=1 // loop_footer
      %s25 = sadd.s32 1, %s21
    $region7: #{tpu_custom_call.1} parent=1 // loop_footer_branch
      %20 = sbr.rel target = $region3
    $region8: #{tpu_custom_call.1} parent=1 // loop_exit
      _
    %490 = vsyncpa [#allocation3], 1
    %s491 = scalar_lea.sflag [#allocation3], 1
    %492 = vsyncpa %s491, 1
    %493 = vsyncpa [#allocation6], 1
    %494 = vsyncpa [#allocation4], 1
    %s495 = scalar_lea.sflag [#allocation4], 1
    %496 = vsyncpa %s495, 1
    %497 = vsyncpa [#allocation9], 1
    %s498 = scalar_lea.sflag [#allocation9], 1
    %499 = vsyncpa %s498, 1

</llo_original>
